<compile_context>
chip_gen: v5e
topology: v5e:2x2
jax: 0.10.0
libtpu: 0.0.40
codegen_flags: <defaults>
</compile_context>

<pallas_src>
import functools

import jax
import jax.numpy as jnp
from jax.experimental import pallas as pl
from jax.experimental.pallas import tpu as pltpu


def _fused_linear_kernel(x_ref, w_ref, b_ref, o_ref):
    # x_ref: (TB, F)   w_ref: (F, O_pad)   b_ref: (1, O_pad)   o_ref: (TB, O_pad)
    y = jnp.dot(x_ref[...], w_ref[...], preferred_element_type=jnp.float32)
    o_ref[...] = (y + b_ref[...]).astype(o_ref.dtype)


@functools.partial(jax.jit, static_argnames=("tile_b",))
def mlp_forward(x, w1, b1, w2, b2, *, tile_b=None):
    """Forward pass of nn_model_0.

    x : (B, F)   w1: (H, F) PyTorch layout   b1: (H,)
                 w2: (O, H) PyTorch layout   b2: (O,)
    Returns (B, O).
    """
    B, F = x.shape
    H = w1.shape[0]
    O = w2.shape[0]

    # --- Algebraic fusion of the two linear layers (glue, hoisted by XLA) ----
    w_eff = w1.T @ w2.T            # (F, O)
    b_eff = b1 @ w2.T + b2         # (O,)

    # --- Lane-dense padding of the output dimension to a multiple of 128 ----
    O_pad = max(128, pl.cdiv(O, 128) * 128)
    w_eff_p = jnp.zeros((F, O_pad), x.dtype).at[:, :O].set(w_eff.astype(x.dtype))
    b_eff_p = jnp.zeros((1, O_pad), x.dtype).at[:, :O].set(b_eff.astype(x.dtype))

    # --- Batch tiling: one big tile for small B, 512-row tiles otherwise ----
    if tile_b is None:
        tile_b = B if B <= 512 else 512
    assert B % tile_b == 0, "batch must be divisible by tile_b"
    assert tile_b == B or tile_b % 8 == 0, "tile_b must be a multiple of 8"
    grid = (B // tile_b,)

    itemsize = jnp.dtype(x.dtype).itemsize
    cost = pl.CostEstimate(
        flops=2 * B * F * O_pad,
        transcendentals=0,
        bytes_accessed=(B * F + F * O_pad + O_pad + B * O_pad) * itemsize,
    )

    out_padded = pl.pallas_call(
        _fused_linear_kernel,
        out_shape=jax.ShapeDtypeStruct((B, O_pad), x.dtype),
        grid_spec=pltpu.PrefetchScalarGridSpec(
            num_scalar_prefetch=0,
            grid=grid,
            in_specs=[
                pl.BlockSpec((tile_b, F), lambda i: (i, 0)),    # x tile
                pl.BlockSpec((F, O_pad), lambda i: (0, 0)),     # fused weight (resident)
                pl.BlockSpec((1, O_pad), lambda i: (0, 0)),     # fused bias (resident)
            ],
            out_specs=pl.BlockSpec((tile_b, O_pad), lambda i: (i, 0)),
        ),
        compiler_params=pltpu.CompilerParams(
            dimension_semantics=("parallel",)),
        cost_estimate=cost,
    )(x, w_eff_p, b_eff_p)

    # Free layout plumbing: strip the lane padding back to the true O.
    return out_padded[:, :O]


def _init_linear(key, out_features, in_features, dtype=jnp.float32):
    """Deterministic PyTorch-style init: U(-1/sqrt(fan_in), 1/sqrt(fan_in))."""
    kw, kb = jax.random.split(key)
    bound = 1.0 / jnp.sqrt(jnp.asarray(in_features, dtype))
    w = jax.random.uniform(kw, (out_features, in_features), dtype,
                           minval=-bound, maxval=bound)
    b = jax.random.uniform(kb, (out_features,), dtype,
                           minval=-bound, maxval=bound)
    return w, b


if __name__ == "__main__":
    # Small shapes consistent with nn_model_0(input_shape, hidden_units, output_shape)
    batch, input_shape, hidden_units, output_shape = 8, 16, 32, 2

    key = jax.random.PRNGKey(0)
    kx, k1, k2 = jax.random.split(key, 3)

    x = jax.random.normal(kx, (batch, input_shape), jnp.float32)
    w1, b1 = _init_linear(k1, hidden_units, input_shape)
    w2, b2 = _init_linear(k2, output_shape, hidden_units)

    out = mlp_forward(x, w1, b1, w2, b2)
    out = jax.block_until_ready(out)

    # Reference check in plain JAX (same math as the PyTorch module).
    ref = (x @ w1.T + b1) @ w2.T + b2
    assert out.shape == (batch, output_shape)
    assert jnp.allclose(out, ref, atol=1e-4, rtol=1e-4), "mismatch vs reference"

    print("KERNEL_OK")
</pallas_src>

<mosaic_0001>
module attributes {stable_mosaic.version = 11 : i64} {
  func.func @_fused_linear_kernel(%arg0: i32, %arg1: memref<8x16xf32, #tpu.memory_space<vmem>>, %arg2: memref<16x128xf32, #tpu.memory_space<vmem>>, %arg3: memref<1x128xf32, #tpu.memory_space<vmem>>, %arg4: memref<8x128xf32, #tpu.memory_space<vmem>>) attributes {dimension_semantics = [#tpu.dimension_semantics<parallel>], iteration_bounds = array<i64: 1>, scalar_prefetch = 0 : i64, scratch_operands = 0 : i64, tpu.core_type = #tpu.core_type<tc>, window_params = [{transform_indices = @transform_0, window_bounds = array<i64: 8, 16>}, {pipeline_mode = #tpu.pipeline_mode<synchronous>, transform_indices = @transform_1, window_bounds = array<i64: 16, 128>}, {pipeline_mode = #tpu.pipeline_mode<synchronous>, transform_indices = @transform_2, window_bounds = array<i64: 1, 128>}, {transform_indices = @transform_3, window_bounds = array<i64: 8, 128>}]} {
    %c0 = arith.constant 0 : index
    %c0_0 = arith.constant 0 : index
    %0 = vector.load %arg1[%c0, %c0_0] : memref<8x16xf32, #tpu.memory_space<vmem>>, vector<8x16xf32>
    %c0_1 = arith.constant 0 : index
    %c0_2 = arith.constant 0 : index
    %1 = vector.load %arg2[%c0_1, %c0_2] : memref<16x128xf32, #tpu.memory_space<vmem>>, vector<16x128xf32>
    %cst = arith.constant dense<0.000000e+00> : vector<8x128xf32>
    %2 = tpu.matmul %0, %1, %cst {dimension_numbers = #tpu.dot_dimension_numbers<[1], [0], [0], [1], [0, 0, 1, 1], [], []>} : vector<8x16xf32>, vector<16x128xf32>, vector<8x128xf32> -> vector<8x128xf32>
    %c0_3 = arith.constant 0 : index
    %c0_4 = arith.constant 0 : index
    %3 = vector.load %arg3[%c0_3, %c0_4] : memref<1x128xf32, #tpu.memory_space<vmem>>, vector<1x128xf32>
    %4 = vector.broadcast %3 : vector<1x128xf32> to vector<8x128xf32>
    %5 = arith.addf %2, %4 : vector<8x128xf32>
    %c0_5 = arith.constant 0 : index
    %c0_6 = arith.constant 0 : index
    %6 = vector.load %arg4[%c0_5, %c0_6] : memref<8x128xf32, #tpu.memory_space<vmem>>, vector<8x128xf32>
    tpu.vector_store %arg4[%c0_5, %c0_6], %5 {strides = array<i32>} : memref<8x128xf32, #tpu.memory_space<vmem>>, vector<8x128xf32>,
    return
  }
  func.func @transform_0(%arg0: i32) -> (i32, i32) {
    %c0_i32 = arith.constant 0 : i32
    %c0_i32_0 = arith.constant 0 : i32
    return %arg0, %c0_i32 : i32, i32
  }
  func.func @transform_1(%arg0: i32) -> (i32, i32) {
    %c0_i32 = arith.constant 0 : i32
    %c0_i32_0 = arith.constant 0 : i32
    %c0_i32_1 = arith.constant 0 : i32
    return %c0_i32, %c0_i32_0 : i32, i32
  }
  func.func @transform_2(%arg0: i32) -> (i32, i32) {
    %c0_i32 = arith.constant 0 : i32
    %c0_i32_0 = arith.constant 0 : i32
    %c0_i32_1 = arith.constant 0 : i32
    return %c0_i32, %c0_i32_0 : i32, i32
  }
  func.func @transform_3(%arg0: i32) -> (i32, i32) {
    %c0_i32 = arith.constant 0 : i32
    %c0_i32_0 = arith.constant 0 : i32
    return %arg0, %c0_i32 : i32, i32
  }
}

</mosaic_0001>

<llo_original>
// kernel: mlp_forward.1
$region0: #{mlp_forward.1}
  #allocation0 [shape = 'u32[]', space=smem, size = 0x4, offset = 0x4, fixed_abs, tag = 'smem constant byte address 0x4 - core index']
  #allocation1 [shape = 'u32[72,128]{1,0:T(1,128)}', space=vmem, size = 0x9000, scoped, tag = 'internal scratch']
  %s0 = inlined_call_operand.vmem [shape: f32[8,16], index: 0, kind: input, shape index: {}]
  %s1 = inlined_call_operand.vmem [shape: f32[16,128], index: 1, kind: input, shape index: {}]
  %s2 = inlined_call_operand.vmem [shape: f32[1,128], index: 2, kind: input, shape index: {}]
  %s3 = inlined_call_operand.vmem [shape: f32[8,128], index: 3, kind: output, shape index: {}]
  %s4 = sld [smem:[#allocation0]]
  $region22: #{mlp_forward.1} parent=0
    _
  %s6 = ssub.s32 1, %s4
  %s7 = scalar_select 0, %s6, %s4
  // Predicated region
  $region2: #{mlp_forward.1} parent=0 // pred_check
    _
  $region3: #{mlp_forward.1} parent=0 // pred_check_branch
    %9 = sbr.rel (0) target = $region5
  $region4: #{mlp_forward.1} parent=0 // pred_region
    _
  $region5: #{mlp_forward.1} parent=0 // pred_fallthru
    _
  // Predicated region
  $region6: #{mlp_forward.1} parent=0 // pred_check
    _
  $region7: #{mlp_forward.1} parent=0 // pred_check_branch
    %11 = sbr.rel (0) target = $region9
  $region8: #{mlp_forward.1} parent=0 // pred_region
    _
  $region9: #{mlp_forward.1} parent=0 // pred_fallthru
    _
  // Predicated region
  $region10: #{mlp_forward.1} parent=0 // pred_check
    _
  $region11: #{mlp_forward.1} parent=0 // pred_check_branch
    %13 = sbr.rel (0) target = $region13
  $region12: #{mlp_forward.1} parent=0 // pred_region
    _
  $region13: #{mlp_forward.1} parent=0 // pred_fallthru
    _
  %v14 = vld [vmem:[%s0] sm:$0xff]
  %v15 = vld [vmem:[%s1] sm:$0xff]
  %v16 = vld [vmem:[%s1 + $0x8] sm:$0xff]
  %v17 = vld [vmem:[%s2] sm:$0x1]
  %v19 = vperm.slane %v17, 0
  %vm21 = vcmask 130048
  %v23 = vsel %vm21, %v14, 0
  %25 = vmatpush.msra.mxu0 0.0
  %26 = vmatpush.msra.mxu0 0.0
  %27 = vmatpush.msra.mxu0 0.0
  %28 = vmatpush.msra.mxu0 0.0
  %29 = vmatpush.msra.mxu0 0.0
  %30 = vmatpush.msra.mxu0 0.0
  %31 = vmatpush.msra.mxu0 0.0
  %32 = vmatpush.msra.mxu0 0.0
  %33 = vmatpush.msra.mxu0 0.0
  %34 = vmatpush.msra.mxu0 0.0
  %35 = vmatpush.msra.mxu0 0.0
  %36 = vmatpush.msra.mxu0 0.0
  %37 = vmatpush.msra.mxu0 0.0
  %38 = vmatpush.msra.mxu0 0.0
  %39 = vmatpush.msra.mxu0 %v16
  %40 = vmatpush.msra.mxu0 %v15
  %41 = vmatmul.f32.gmra.mxu0 %v23
  %v42 = vpop.f32.mrf.mxu0
  %v43 = vadd.f32 %v19, %v42
  %44 = vdwg.mxu0
  %45 = vst [vmem:[%s3] sm:$0xff] %v43
  // Predicated region
  $region14: #{mlp_forward.1} parent=0 // pred_check
    _
  $region15: #{mlp_forward.1} parent=0 // pred_check_branch
    %47 = sbr.rel (0) target = $region17
  $region16: #{mlp_forward.1} parent=0 // pred_region
    _
  $region17: #{mlp_forward.1} parent=0 // pred_fallthru
    _
  // Predicated region
  $region18: #{mlp_forward.1} parent=0 // pred_check
    _
  $region19: #{mlp_forward.1} parent=0 // pred_check_branch
    %49 = sbr.rel (0) target = $region21
  $region20: #{mlp_forward.1} parent=0 // pred_region
    _
  $region21: #{mlp_forward.1} parent=0 // pred_fallthru
    _

</llo_original>
